<compile_context>
chip_gen: v5e
topology: v5e:2x2
jax: 0.10.0
libtpu: 0.0.40
codegen_flags: <defaults>
</compile_context>

<pallas_src>
import functools

import jax
import jax.numpy as jnp
from jax.experimental import pallas as pl
from jax.experimental.pallas import tpu as pltpu


def _round_up(a, b):
    return ((a + b - 1) // b) * b


def _residual_kernel(alpha_ref, beta_ref, x_ref, w_ref, b_ref, o_ref, *, d_model, eps):
    # x tile in f32 for the LayerNorm statistics.
    x = x_ref[...].astype(jnp.float32)                                # (TM, D)

    # --- LayerNormalization (matches the PyTorch module: unbiased std, eps on std) ---
    # Single sweep: sum(x) and sum(x*x) together, then unbiased variance.
    s1 = jnp.sum(x, axis=-1, keepdims=True)                           # (TM, 1)
    s2 = jnp.sum(x * x, axis=-1, keepdims=True)                       # (TM, 1)
    mean = s1 * (1.0 / d_model)
    var = jnp.maximum(s2 - s1 * mean, 0.0) * (1.0 / (d_model - 1))
    std = jnp.sqrt(var)
    # Narrow reciprocal on the (TM, 1) column (EUP slot), broadcast the multiply.
    inv = pl.reciprocal(std + eps, approx=True)
    alpha = alpha_ref[0]
    beta = beta_ref[0]
    normed = alpha * ((x - mean) * inv) + beta                        # (TM, D), f32

    # --- sublayer: Linear(d_model -> d_model) on the MXU, bf16 in / f32 accumulate ---
    y = jnp.dot(normed.astype(jnp.bfloat16), w_ref[...],
                preferred_element_type=jnp.float32)
    y = y + b_ref[...].astype(jnp.float32)                            # (TM, D)

    # --- dropout (eval mode => identity) + residual add ---
    o_ref[...] = (x + y).astype(o_ref.dtype)


def residual_connection(x, w, b, alpha, beta, *, eps=1e-6, tile_rows=256):
    """x: (B, S, D) float32.  Returns x + Linear(LayerNorm(x))."""
    B, S, D = x.shape
    rows = B * S

    # Row tile: MXU-height-friendly (default 256) but no larger than the problem
    # itself; always a multiple of 8 sublanes.
    tile_rows = max(8, min(_round_up(tile_rows, 8), _round_up(rows, 8)))
    padded_rows = _round_up(rows, tile_rows)

    x2d = x.reshape(rows, D)
    if padded_rows != rows:
        x2d = jnp.pad(x2d, ((0, padded_rows - rows), (0, 0)))

    # Weight fed to the MXU in bf16 (halves resident VMEM + DMA, hits bf16 peak).
    w_bf16 = w.astype(jnp.bfloat16)

    kernel = functools.partial(_residual_kernel, d_model=D, eps=eps)
    grid = (padded_rows // tile_rows,)

    # VMEM budget: double-buffered f32 row tiles (in + out) + resident bf16
    # weight (double-buffered) + bias, with margin; capped below v7x's 64 MiB.
    vmem_bytes = (2 * tile_rows * D * 4      # x tiles
                  + 2 * tile_rows * D * 4    # out tiles
                  + 2 * D * D * 2            # bf16 weight
                  + 2 * D * 4)               # bias
    vmem_limit = min(max(int(vmem_bytes * 1.5) + (1 << 20), 8 << 20), 48 << 20)

    cost = pl.CostEstimate(
        flops=2 * padded_rows * D * D,
        transcendentals=2 * padded_rows,          # sqrt + reciprocal per row
        bytes_accessed=2 * padded_rows * D * 4 + D * D * 2 + D * 4,
    )

    out2d = pl.pallas_call(
        kernel,
        out_shape=jax.ShapeDtypeStruct((padded_rows, D), x.dtype),
        grid_spec=pltpu.PrefetchScalarGridSpec(
            num_scalar_prefetch=0,
            grid=grid,
            in_specs=[
                # learnable LayerNorm scalars alpha / bias, kept in SMEM
                pl.BlockSpec(memory_space=pltpu.MemorySpace.SMEM),
                pl.BlockSpec(memory_space=pltpu.MemorySpace.SMEM),
                # activation row-tile
                pl.BlockSpec((tile_rows, D), lambda i: (i, 0)),
                # sublayer weight / bias (resident across the whole grid)
                pl.BlockSpec((D, D), lambda i: (0, 0)),
                pl.BlockSpec((1, D), lambda i: (0, 0)),
            ],
            out_specs=pl.BlockSpec((tile_rows, D), lambda i: (i, 0)),
        ),
        compiler_params=pltpu.CompilerParams(
            dimension_semantics=("parallel",),   # shards row tiles across TCs on v7x
            vmem_limit_bytes=vmem_limit,
        ),
        cost_estimate=cost,
    )(alpha, beta, x2d, w_bf16, b)

    if padded_rows != rows:
        out2d = out2d[:rows]
    return out2d.reshape(B, S, D)


def _reference(x, w, b, alpha, beta, eps=1e-6):
    mean = jnp.mean(x, axis=-1, keepdims=True)
    std = jnp.sqrt(jnp.sum((x - mean) ** 2, axis=-1, keepdims=True) / (x.shape[-1] - 1))
    normed = alpha[0] * (x - mean) / (std + eps) + beta[0]
    y = normed @ w + b[0]
    return x + y


if __name__ == "__main__":
    B, S, D = 2, 8, 128  # batch, seq_len, d_model

    key = jax.random.PRNGKey(0)
    kx, kw, kb = jax.random.split(key, 3)

    x = jax.random.normal(kx, (B, S, D), dtype=jnp.float32)

    # Deterministic "sublayer" (Linear) parameters, PyTorch-style uniform init.
    bound = 1.0 / (D ** 0.5)
    w = jax.random.uniform(kw, (D, D), jnp.float32, -bound, bound)
    b = jax.random.uniform(kb, (1, D), jnp.float32, -bound, bound)

    # LayerNormalization learnable scalars (as initialized in __init__).
    alpha = jnp.ones((1,), jnp.float32)
    beta = jnp.zeros((1,), jnp.float32)

    out = residual_connection(x, w, b, alpha, beta)
    out = jax.block_until_ready(out)

    ref = _reference(x, w, b, alpha, beta)
    assert out.shape == (B, S, D)
    # Tolerance loosened for the bf16-fed MXU + approx reciprocal (f32 accumulate).
    assert jnp.allclose(out, ref, atol=2e-2, rtol=2e-2)

    print("KERNEL_OK")
</pallas_src>

<mosaic_0001>
module attributes {stable_mosaic.version = 11 : i64} {
  func.func @_residual_kernel(%arg0: i32, %arg1: memref<1xf32, #tpu.memory_space<smem>>, %arg2: memref<1xf32, #tpu.memory_space<smem>>, %arg3: memref<16x128xf32, #tpu.memory_space<vmem>>, %arg4: memref<128x128xbf16, #tpu.memory_space<vmem>>, %arg5: memref<1x128xf32, #tpu.memory_space<vmem>>, %arg6: memref<16x128xf32, #tpu.memory_space<vmem>>) attributes {dimension_semantics = [#tpu.dimension_semantics<parallel>], iteration_bounds = array<i64: 1>, scalar_prefetch = 0 : i64, scratch_operands = 0 : i64, tpu.core_type = #tpu.core_type<tc>, window_params = [{transform_indices = @transform_0, window_bounds = array<i64: 1>}, {transform_indices = @transform_1, window_bounds = array<i64: 1>}, {transform_indices = @transform_2, window_bounds = array<i64: 16, 128>}, {pipeline_mode = #tpu.pipeline_mode<synchronous>, transform_indices = @transform_3, window_bounds = array<i64: 128, 128>}, {pipeline_mode = #tpu.pipeline_mode<synchronous>, transform_indices = @transform_4, window_bounds = array<i64: 1, 128>}, {transform_indices = @transform_5, window_bounds = array<i64: 16, 128>}]} {
    %c0 = arith.constant 0 : index
    %c0_0 = arith.constant 0 : index
    %0 = vector.load %arg3[%c0, %c0_0] : memref<16x128xf32, #tpu.memory_space<vmem>>, vector<16x128xf32>
    %cst = arith.constant dense<0.000000e+00> : vector<16xf32>
    %1 = vector.multi_reduction <add>, %0, %cst [1] : vector<16x128xf32> to vector<16xf32>
    %2 = vector.shape_cast %1 : vector<16xf32> to vector<16x1xf32>
    %3 = arith.mulf %0, %0 : vector<16x128xf32>
    %cst_1 = arith.constant dense<0.000000e+00> : vector<16xf32>
    %4 = vector.multi_reduction <add>, %3, %cst_1 [1] : vector<16x128xf32> to vector<16xf32>
    %5 = vector.shape_cast %4 : vector<16xf32> to vector<16x1xf32>
    %cst_2 = arith.constant 7.812500e-03 : f32
    %6 = vector.broadcast %cst_2 : f32 to vector<16x1xf32>
    %7 = arith.mulf %2, %6 : vector<16x1xf32>
    %8 = arith.mulf %2, %7 : vector<16x1xf32>
    %9 = arith.subf %5, %8 : vector<16x1xf32>
    %cst_3 = arith.constant 0.000000e+00 : f32
    %10 = vector.broadcast %cst_3 : f32 to vector<16x1xf32>
    %11 = arith.maximumf %9, %10 : vector<16x1xf32>
    %cst_4 = arith.constant 0.00787401571 : f32
    %12 = vector.broadcast %cst_4 : f32 to vector<16x1xf32>
    %13 = arith.mulf %11, %12 : vector<16x1xf32>
    %14 = math.sqrt %13 : vector<16x1xf32>
    %cst_5 = arith.constant 9.99999997E-7 : f32
    %15 = vector.broadcast %cst_5 : f32 to vector<16x1xf32>
    %16 = arith.addf %14, %15 : vector<16x1xf32>
    %17 = tpu.reciprocal %16 {approx = true} : vector<16x1xf32> -> vector<16x1xf32>
    %c0_6 = arith.constant 0 : index
    %18 = memref.load %arg1[%c0_6] : memref<1xf32, #tpu.memory_space<smem>>
    %c0_7 = arith.constant 0 : index
    %19 = memref.load %arg2[%c0_7] : memref<1xf32, #tpu.memory_space<smem>>
    %20 = vector.broadcast %7 : vector<16x1xf32> to vector<16x128xf32>
    %21 = arith.subf %0, %20 : vector<16x128xf32>
    %22 = vector.broadcast %17 : vector<16x1xf32> to vector<16x128xf32>
    %23 = arith.mulf %21, %22 : vector<16x128xf32>
    %24 = vector.broadcast %18 : f32 to vector<16x128xf32>
    %25 = arith.mulf %24, %23 : vector<16x128xf32>
    %26 = vector.broadcast %19 : f32 to vector<16x128xf32>
    %27 = arith.addf %25, %26 : vector<16x128xf32>
    %28 = arith.truncf %27 : vector<16x128xf32> to vector<16x128xbf16>
    %c0_8 = arith.constant 0 : index
    %c0_9 = arith.constant 0 : index
    %29 = vector.load %arg4[%c0_8, %c0_9] : memref<128x128xbf16, #tpu.memory_space<vmem>>, vector<128x128xbf16>
    %cst_10 = arith.constant dense<0.000000e+00> : vector<16x128xf32>
    %30 = tpu.matmul %28, %29, %cst_10 {dimension_numbers = #tpu.dot_dimension_numbers<[1], [0], [0], [1], [0, 0, 1, 1], [], []>} : vector<16x128xbf16>, vector<128x128xbf16>, vector<16x128xf32> -> vector<16x128xf32>
    %c0_11 = arith.constant 0 : index
    %c0_12 = arith.constant 0 : index
    %31 = vector.load %arg5[%c0_11, %c0_12] : memref<1x128xf32, #tpu.memory_space<vmem>>, vector<1x128xf32>
    %32 = vector.broadcast %31 : vector<1x128xf32> to vector<16x128xf32>
    %33 = arith.addf %30, %32 : vector<16x128xf32>
    %34 = arith.addf %0, %33 : vector<16x128xf32>
    %c0_13 = arith.constant 0 : index
    %c0_14 = arith.constant 0 : index
    %35 = vector.load %arg6[%c0_13, %c0_14] : memref<16x128xf32, #tpu.memory_space<vmem>>, vector<16x128xf32>
    tpu.vector_store %arg6[%c0_13, %c0_14], %34 {strides = array<i32>} : memref<16x128xf32, #tpu.memory_space<vmem>>, vector<16x128xf32>,
    return
  }
  func.func @transform_0(%arg0: i32) -> i32 {
    %c0_i32 = arith.constant 0 : i32
    %c0_i32_0 = arith.constant 0 : i32
    return %c0_i32 : i32
  }
  func.func @transform_1(%arg0: i32) -> i32 {
    %c0_i32 = arith.constant 0 : i32
    %c0_i32_0 = arith.constant 0 : i32
    return %c0_i32 : i32
  }
  func.func @transform_2(%arg0: i32) -> (i32, i32) {
    %c0_i32 = arith.constant 0 : i32
    %c0_i32_0 = arith.constant 0 : i32
    return %arg0, %c0_i32 : i32, i32
  }
  func.func @transform_3(%arg0: i32) -> (i32, i32) {
    %c0_i32 = arith.constant 0 : i32
    %c0_i32_0 = arith.constant 0 : i32
    %c0_i32_1 = arith.constant 0 : i32
    return %c0_i32, %c0_i32_0 : i32, i32
  }
  func.func @transform_4(%arg0: i32) -> (i32, i32) {
    %c0_i32 = arith.constant 0 : i32
    %c0_i32_0 = arith.constant 0 : i32
    %c0_i32_1 = arith.constant 0 : i32
    return %c0_i32, %c0_i32_0 : i32, i32
  }
  func.func @transform_5(%arg0: i32) -> (i32, i32) {
    %c0_i32 = arith.constant 0 : i32
    %c0_i32_0 = arith.constant 0 : i32
    return %arg0, %c0_i32 : i32, i32
  }
}

</mosaic_0001>

<llo_original>
// kernel: tpu_custom_call.1
$region0: #{tpu_custom_call.1}
  #allocation0 [shape = 'u32[]', space=smem, size = 0x4, offset = 0x4, fixed_abs, tag = 'smem constant byte address 0x4 - core index']
  #allocation1 [shape = 'u32[72,128]{1,0:T(1,128)}', space=vmem, size = 0x9000, scoped, tag = 'internal scratch']
  #allocation2 [shape = 'f32[1]{0:T(128)S(6)}', space=smem, size = 0x200, scoped, tag = 'scoped memory for tpu_custom_call.1']
  #allocation3 [shape = 'f32[1]{0:T(128)S(6)}', space=smem, size = 0x200, scoped, tag = 'scoped memory for tpu_custom_call.1']
  %s0 = inlined_call_operand.<no memory space> [shape: f32[1], index: 0, kind: input, shape index: {}]
  %s1 = inlined_call_operand.<no memory space> [shape: f32[1], index: 1, kind: input, shape index: {}]
  %s2 = inlined_call_operand.hbm [shape: f32[16,128], index: 2, kind: input, shape index: {}]
  %s3 = inlined_call_operand.hbm [shape: bf16[128,128], index: 3, kind: input, shape index: {}]
  %s4 = inlined_call_operand.vmem [shape: f32[1,128], index: 4, kind: input, shape index: {}]
  %s5 = inlined_call_operand.hbm [shape: f32[16,128], index: 5, kind: output, shape index: {}]
  %s6 = sld [smem:[#allocation0]]
  $region38: #{tpu_custom_call.1} parent=0
    _
  %s8 = ssub.s32 1, %s6
  %s9 = scalar_select 0, %s8, %s6
  %10 = sst [smem:[#allocation2]] %s0
  %11 = sst [smem:[#allocation3]] %s1
  $region1: #{tpu_custom_call.1} parent=0
    #allocation4 [shape = 'u8[8192]{0}', space=vmem, size = 0x2000, scoped, tag = 'input window, operand 2, single buffered']
    #allocation5 [shape = 's32[1]{0}', space=sflag, size = 0x4, scoped, tag = 'scoped memory for tpu_custom_call.1']
    #allocation6 [shape = 's32[1]{0}', space=sflag, size = 0x4, scoped, tag = 'scoped memory for tpu_custom_call.1']
    #allocation7 [shape = 'u8[32768]{0}', space=vmem, size = 0x8000, scoped, tag = 'input window, operand 3, single buffered']
    #allocation8 [shape = 's32[1]{0}', space=sflag, size = 0x4, scoped, tag = 'scoped memory for tpu_custom_call.1']
    #allocation9 [shape = 'u8[8192]{0}', space=vmem, size = 0x2000, scoped, tag = 'output window, operand 0, single buffered']
    %12 = vsyncpa [#allocation5], 0
    %13 = vsyncpa [#allocation8], 0
    %14 = vsyncpa [#allocation6], 0
    // Predicated region
    $region2: #{tpu_custom_call.1} parent=1 // pred_check
      _
    $region3: #{tpu_custom_call.1} parent=1 // pred_check_branch
      %16 = sbr.rel (0) target = $region5
    $region4: #{tpu_custom_call.1} parent=1 // pred_region
      _
    $region5: #{tpu_custom_call.1} parent=1 // pred_fallthru
      _
    // Predicated region
    $region6: #{tpu_custom_call.1} parent=1 // pred_check
      _
    $region7: #{tpu_custom_call.1} parent=1 // pred_check_branch
      %18 = sbr.rel (0) target = $region9
    $region8: #{tpu_custom_call.1} parent=1 // pred_region
      _
    $region9: #{tpu_custom_call.1} parent=1 // pred_fallthru
      _
    // Predicated region
    $region10: #{tpu_custom_call.1} parent=1 // pred_check
      _
    $region11: #{tpu_custom_call.1} parent=1 // pred_check_branch
      %20 = sbr.rel (0) target = $region13
    $region12: #{tpu_custom_call.1} parent=1 // pred_region
      %22 = vsyncadd [#allocation5], 0
      %s23 = sshll.u32 %s2, 4
      %s24 = int_to_ptr.hbm [resolvable:$true] %s23
      %s25 = sshll.u32 [#allocation4], 4
      %s26 = int_to_ptr.vmem [resolvable:$true] %s25
      %31 = dma.hbm_to_vmem [thread:$0]  %s24, 256, %s26, [#allocation5], 128, 128, 8
    $region13: #{tpu_custom_call.1} parent=1 // pred_fallthru
      _
    // Predicated region
    $region14: #{tpu_custom_call.1} parent=1 // pred_check
      _
    $region15: #{tpu_custom_call.1} parent=1 // pred_check_branch
      %33 = sbr.rel (0) target = $region17
    $region16: #{tpu_custom_call.1} parent=1 // pred_region
      %35 = vsyncadd [#allocation8], 0
      %s36 = sshll.u32 %s3, 4
      %s37 = int_to_ptr.hbm [resolvable:$true] %s36
      %s38 = sshll.u32 [#allocation7], 4
      %s39 = int_to_ptr.vmem [resolvable:$true] %s38
      %44 = dma.hbm_to_vmem [thread:$0]  %s37, 1024, %s39, [#allocation8], 64, 64, 4
    $region17: #{tpu_custom_call.1} parent=1 // pred_fallthru
      _
    // Predicated region
    $region18: #{tpu_custom_call.1} parent=1 // pred_check
      _
    $region19: #{tpu_custom_call.1} parent=1 // pred_check_branch
      %46 = sbr.rel (0) target = $region21
    $region20: #{tpu_custom_call.1} parent=1 // pred_region
      _
    $region21: #{tpu_custom_call.1} parent=1 // pred_fallthru
      _
    // Predicated region
    $region22: #{tpu_custom_call.1} parent=1 // pred_check
      _
    $region23: #{tpu_custom_call.1} parent=1 // pred_check_branch
      %48 = sbr.rel (0) target = $region25
    $region24: #{tpu_custom_call.1} parent=1 // pred_region
      %50 = dma.done [#allocation5], 256
    $region25: #{tpu_custom_call.1} parent=1 // pred_fallthru
      _
    // Predicated region
    $region26: #{tpu_custom_call.1} parent=1 // pred_check
      _
    $region27: #{tpu_custom_call.1} parent=1 // pred_check_branch
      %52 = sbr.rel (0) target = $region29
    $region28: #{tpu_custom_call.1} parent=1 // pred_region
      %54 = dma.done [#allocation8], 1024
    $region29: #{tpu_custom_call.1} parent=1 // pred_fallthru
      _
    %v55 = vld [vmem:[#allocation4] sm:$0xff]
    %v56 = vld [vmem:[#allocation4 + $0x8] sm:$0xff]
    %57 = vadd.xlane.f32.xlu0 %v55
    %v58 = vpop.xlane.xlu0 %57
    %59 = vadd.xlane.f32.xlu0 %v56
    %v60 = vpop.xlane.xlu0 %59
    %v61 = vmul.f32 %v55, %v55
    %v62 = vmul.f32 %v56, %v56
    %63 = vadd.xlane.f32.xlu0 %v61
    %v64 = vpop.xlane.xlu0 %63
    %65 = vadd.xlane.f32.xlu0 %v62
    %v66 = vpop.xlane.xlu0 %65
    %v67 = vmul.f32 %v58, 0.0078125
    %v68 = vmul.f32 %v60, 0.0078125
    %v69 = vmul.f32 %v58, %v67
    %v70 = vmul.f32 %v60, %v68
    %v71 = vsub.f32 %v64, %v69
    %v72 = vsub.f32 %v66, %v70
    %v73 = vmax.f32 %v71, 0.0
    %v74 = vmax.f32 %v72, 0.0
    %v75 = vmul.f32 %v73, 0.007874016
    %v76 = vmul.f32 %v74, 0.007874016
    %v77 = vrsqrt.pop %v75
    %v78 = vmul.f32 %v77, %v75
    %v79 = vmul.f32 %v78, %v77
    %v80 = vmul.f32 0.5, %v79
    %v81 = vsub.f32 1.5, %v80
    %v82 = vmul.f32 %v77, %v81
    %v83 = vmul.f32 %v75, %v82
    %vm84 = vcmp.eq.f32.partialorder %v75, inf
    %v85 = vsel %vm84, %v75, %v83
    %vm86 = vcmp.eq.f32.partialorder %v75, 0.0
    %v87 = vand.u32 %v75, 2147483648
    %v88 = vsel %vm86, %v87, %v85
    %v89 = vrsqrt.pop %v76
    %v90 = vmul.f32 %v89, %v76
    %v91 = vmul.f32 %v90, %v89
    %v92 = vmul.f32 0.5, %v91
    %v93 = vsub.f32 1.5, %v92
    %v94 = vmul.f32 %v89, %v93
    %v95 = vmul.f32 %v76, %v94
    %vm96 = vcmp.eq.f32.partialorder %v76, inf
    %v97 = vsel %vm96, %v76, %v95
    %vm98 = vcmp.eq.f32.partialorder %v76, 0.0
    %v99 = vand.u32 %v76, 2147483648
    %v100 = vsel %vm98, %v99, %v97
    %v101 = vadd.f32 %v88, 1e-06
    %v102 = vadd.f32 %v100, 1e-06
    %v103 = vrcp.pop %v101
    %v104 = vrcp.pop %v102
    %s105 = sld [smem:[#allocation2]]
    %s106 = sld [smem:[#allocation3]]
    %v107 = vsub.f32 %v55, %v67
    %v108 = vsub.f32 %v56, %v68
    %v109 = vmul.f32 %v107, %v103
    %v110 = vmul.f32 %v108, %v104
    %v111 = vstv %s105
    %v112 = vmul.f32 %v111, %v109
    %v113 = vmul.f32 %v111, %v110
    %v114 = vstv %s106
    %v115 = vadd.f32 %v112, %v114
    %v116 = vadd.f32 %v113, %v114
    %v117 = vpack.c.bf16 %v116, %v115
    %v118 = vld [vmem:[#allocation7] sm:$0xf]
    %v119 = vld [vmem:[#allocation7 + $0x4] sm:$0xf]
    %v120 = vld [vmem:[#allocation7 + $0x8] sm:$0xf]
    %v121 = vld [vmem:[#allocation7 + $0xc] sm:$0xf]
    %v122 = vld [vmem:[#allocation7 + $0x10] sm:$0xf]
    %v123 = vld [vmem:[#allocation7 + $0x14] sm:$0xf]
    %v124 = vld [vmem:[#allocation7 + $0x18] sm:$0xf]
    %v125 = vld [vmem:[#allocation7 + $0x1c] sm:$0xf]
    %v126 = vld [vmem:[#allocation7 + $0x20] sm:$0xf]
    %v127 = vld [vmem:[#allocation7 + $0x24] sm:$0xf]
    %v128 = vld [vmem:[#allocation7 + $0x28] sm:$0xf]
    %v129 = vld [vmem:[#allocation7 + $0x2c] sm:$0xf]
    %v130 = vld [vmem:[#allocation7 + $0x30] sm:$0xf]
    %v131 = vld [vmem:[#allocation7 + $0x34] sm:$0xf]
    %v132 = vld [vmem:[#allocation7 + $0x38] sm:$0xf]
    %v133 = vld [vmem:[#allocation7 + $0x3c] sm:$0xf]
    %v134 = vld [vmem:[%s4] sm:$0x1]
    %v136 = vperm.slane %v134, 0
    %v154 = vunpack.c.l.b16 %v118
    %v155 = vunpack.c.l.b16 %v119
    %v156 = vunpack.c.l.b16 %v120
    %v157 = vunpack.c.l.b16 %v121
    %v158 = vunpack.c.l.b16 %v122
    %v159 = vunpack.c.l.b16 %v123
    %v160 = vunpack.c.l.b16 %v124
    %v161 = vunpack.c.l.b16 %v125
    %v162 = vunpack.c.l.b16 %v126
    %v163 = vunpack.c.l.b16 %v127
    %v164 = vunpack.c.l.b16 %v128
    %v165 = vunpack.c.l.b16 %v129
    %v166 = vunpack.c.l.b16 %v130
    %v167 = vunpack.c.l.b16 %v131
    %v168 = vunpack.c.l.b16 %v132
    %v169 = vunpack.c.l.b16 %v133
    %v170 = vpack.c.b16 %v155, %v154
    %v171 = vpack.c.b16 %v157, %v156
    %v172 = vpack.c.b16 %v159, %v158
    %v173 = vpack.c.b16 %v161, %v160
    %v174 = vpack.c.b16 %v163, %v162
    %v175 = vpack.c.b16 %v165, %v164
    %v176 = vpack.c.b16 %v167, %v166
    %v177 = vpack.c.b16 %v169, %v168
    %186 = vmatpush.bf16.msra.mxu0 %v177
    %187 = vmatpush.bf16.msra.mxu0 %v176
    %188 = vmatpush.bf16.msra.mxu0 %v175
    %189 = vmatpush.bf16.msra.mxu0 %v174
    %190 = vmatpush.bf16.msra.mxu0 %v173
    %191 = vmatpush.bf16.msra.mxu0 %v172
    %192 = vmatpush.bf16.msra.mxu0 %v171
    %193 = vmatpush.bf16.msra.mxu0 %v170
    %194 = vmatmul.bf16.gmra.mxu0 %v117
    %v195 = vpop.f32.mrf.mxu0
    %v196 = vadd.f32 %v136, %v195
    %v197 = vpop.f32.mrf.mxu0
    %v198 = vadd.f32 %v136, %v197
    %199 = vdwg.mxu0
    %v200 = vadd.f32 %v55, %v196
    %v201 = vadd.f32 %v56, %v198
    %202 = vst [vmem:[#allocation9] sm:$0xff] %v200
    %203 = vst [vmem:[#allocation9 + $0x8] sm:$0xff] %v201
    // Predicated region
    $region30: #{tpu_custom_call.1} parent=1 // pred_check
      _
    $region31: #{tpu_custom_call.1} parent=1 // pred_check_branch
      %205 = sbr.rel (0) target = $region33
    $region32: #{tpu_custom_call.1} parent=1 // pred_region
      %207 = vsyncadd [#allocation6], 0
      %s208 = sshll.u32 [#allocation9], 4
      %s209 = int_to_ptr.vmem [resolvable:$true] %s208
      %s210 = sshll.u32 %s5, 4
      %s211 = int_to_ptr.hbm [resolvable:$true] %s210
      %216 = dma.vmem_to_hbm [thread:$0]  %s209, 256, %s211, [#allocation6], 128, 128, 8
    $region33: #{tpu_custom_call.1} parent=1 // pred_fallthru
      _
    // Predicated region
    $region34: #{tpu_custom_call.1} parent=1 // pred_check
      _
    $region35: #{tpu_custom_call.1} parent=1 // pred_check_branch
      %218 = sbr.rel (0) target = $region37
    $region36: #{tpu_custom_call.1} parent=1 // pred_region
      %220 = dma.done [#allocation6], 256
    $region37: #{tpu_custom_call.1} parent=1 // pred_fallthru
      _
    %221 = vsyncpa [#allocation5], 1
    %222 = vsyncpa [#allocation8], 1
    %223 = vsyncpa [#allocation6], 1

</llo_original>
